<compile_context>
chip_gen: v7x
topology: tpu7x:2x2x1
jax: 0.10.0
libtpu: 0.0.40
codegen_flags: <defaults>
</compile_context>

<pallas_src>
import math
from functools import partial

import jax
import jax.numpy as jnp
from jax.experimental import pallas as pl
from jax.experimental.pallas import tpu as pltpu

HEADS, DIM_HEAD = 4, 32
HIDDEN = HEADS * DIM_HEAD  # 128

# Route a matmul to the Pallas MXU kernel only when it fills >=2 128-row tiles
# and the output last dim is lane-dense; everything smaller stays in XLA where
# it fuses with the surrounding elementwise ops.
_PALLAS_MIN_M = 256
_PALLAS_MIN_N = 128


def _round_up(x, m):
    return ((x + m - 1) // m) * m


def _default_vmem_limit():
    """Chip-aware scoped-VMEM budget (~half of physical, capped)."""
    try:
        cap = int(pltpu.get_tpu_info().vmem_capacity_bytes)
        return int(max(32 * 1024 * 1024, min(cap // 2, 96 * 1024 * 1024)))
    except Exception:
        return 32 * 1024 * 1024


_VMEM_LIMIT = _default_vmem_limit()


def _gelu_tanh(x):
    # tanh-approx GELU used inside the Pallas epilogue (EUP-friendly; deviates
    # from the exact erf GELU by <~3e-3).
    c = 0.7978845608028654  # sqrt(2/pi)
    return 0.5 * x * (1.0 + jnp.tanh(c * (x + 0.044715 * x * x * x)))


# ---------------------------------------------------------------------------
# Pallas kernels
# ---------------------------------------------------------------------------

def _mm_kernel(*refs, has_bias, multi_k, act):
    """Tiled matmul: bf16 operands, f32 accumulation, fused bias/GELU epilogue.

    Ref layout (depending on static flags):
        a_ref, b_ref, [bias_ref], o_ref, [acc_ref]
    """
    a_ref, b_ref = refs[0], refs[1]
    idx = 2
    bias_ref = None
    if has_bias:
        bias_ref = refs[idx]
        idx += 1
    o_ref = refs[idx]
    idx += 1
    acc_ref = refs[idx] if multi_k else None

    def _finish(res):
        if has_bias:
            res = res + bias_ref[...]
        if act == "gelu":
            res = _gelu_tanh(res)
        return res.astype(o_ref.dtype)

    if multi_k:
        @pl.when(pl.program_id(2) == 0)
        def _init():
            acc_ref[...] = jnp.zeros_like(acc_ref)

        acc_ref[...] += jnp.dot(a_ref[...], b_ref[...],
                                preferred_element_type=jnp.float32)

        @pl.when(pl.program_id(2) == pl.num_programs(2) - 1)
        def _store():
            o_ref[...] = _finish(acc_ref[...])
    else:
        o_ref[...] = _finish(jnp.dot(a_ref[...], b_ref[...],
                                     preferred_element_type=jnp.float32))


def _pallas_matmul(a, b, bias, act):
    """(M,K)@(K,N) (+bias, +GELU) -> (M,N) f32 via the MXU."""
    M, K = a.shape
    N = b.shape[1]
    a = a.astype(jnp.bfloat16)
    b = b.astype(jnp.bfloat16)
    has_bias = bias is not None

    # M: pad to a multiple of 128 (M >= 256 here, so the "parallel" M axis
    # always has >= 2 blocks -> both TensorCores busy on v7x).
    tm = 128
    Mp = _round_up(M, tm)
    if Mp != M:
        a = jnp.pad(a, ((0, Mp - M), (0, 0)))

    # N: full-extent block when small enough (no pad, no output slice).
    if N <= 512:
        tn, Np = N, N
    else:
        tn = 256 if N % 256 == 0 else 128
        Np = _round_up(N, tn)
        if Np != N:
            b = jnp.pad(b, ((0, 0), (0, Np - N)))

    # K: single accumulation step when small; otherwise prefer a divisor of K
    # (avoids padding both operands).
    if K <= 2048:
        tk, Kp = K, K
    else:
        tk = None
        for cand in (2048, 1536, 1024, 768, 512, 384, 256):
            if K % cand == 0:
                tk = cand
                break
        if tk is None:
            tk = 512
        Kp = _round_up(K, tk)
        if Kp != K:
            a = jnp.pad(a, ((0, 0), (0, Kp - K)))
            b = jnp.pad(b, ((0, Kp - K), (0, 0)))

    multi_k = (Kp // tk) > 1
    kernel = partial(_mm_kernel, has_bias=has_bias, multi_k=multi_k, act=act)

    in_specs = [pl.BlockSpec((tm, tk), lambda i, j, k: (i, k)),
                pl.BlockSpec((tk, tn), lambda i, j, k: (k, j))]
    operands = [a, b]
    if has_bias:
        bias_row = bias.reshape(1, N).astype(jnp.float32)
        if Np != N:
            bias_row = jnp.pad(bias_row, ((0, 0), (0, Np - N)))
        in_specs.append(pl.BlockSpec((1, tn), lambda i, j, k: (0, j)))
        operands.append(bias_row)

    scratch = [pltpu.VMEM((tm, tn), jnp.float32)] if multi_k else []

    out = pl.pallas_call(
        kernel,
        out_shape=jax.ShapeDtypeStruct((Mp, Np), jnp.float32),
        grid_spec=pltpu.PrefetchScalarGridSpec(
            num_scalar_prefetch=0,
            grid=(Mp // tm, Np // tn, Kp // tk),
            in_specs=in_specs,
            out_specs=pl.BlockSpec((tm, tn), lambda i, j, k: (i, j)),
            scratch_shapes=scratch),
        compiler_params=pltpu.CompilerParams(
            dimension_semantics=("parallel", "parallel", "arbitrary"),
            vmem_limit_bytes=_VMEM_LIMIT),
    )(*operands)

    if Mp != M or Np != N:
        out = out[:M, :N]
    return out


def matmul2d(a, b, bias=None, act=None):
    """f32 matmul + optional bias/GELU; Pallas for large shapes, XLA for tiny."""
    M = a.shape[0]
    N = b.shape[1]
    if M >= _PALLAS_MIN_M and N >= _PALLAS_MIN_N:
        return _pallas_matmul(a, b, bias, act)
    out = jnp.dot(a.astype(jnp.float32), b.astype(jnp.float32),
                  preferred_element_type=jnp.float32)
    if bias is not None:
        out = out + bias.reshape(1, -1).astype(jnp.float32)
    if act == "gelu":
        out = jax.nn.gelu(out, approximate=False)
    return out


def _dw_kernel(x_ref, w_ref, b_ref, o_ref, *, H, W, C):
    """Depthwise 7x7, one padded sample per grid step.

    x_ref: (1, H+6, (W+6)*C)  -- W and C merged on the lane axis
    w_ref: (49, W*C)          -- per-tap channel weights tiled along W
    b_ref: (1, W*C)
    o_ref: (1, H, W*C)
    """
    wc = W * C
    acc = jnp.zeros((H, wc), jnp.float32)
    for ky in range(7):
        rows = x_ref[0, ky:ky + H, :]                    # (H, (W+6)*C)
        for kx in range(7):
            tap = rows[:, kx * C:kx * C + wc]            # shifted lane slice
            acc = acc + tap * w_ref[ky * 7 + kx, :]
    o_ref[0] = (acc + b_ref[0, :]).astype(o_ref.dtype)


def depthwise_conv7(x, w, b):
    """x: (B,H,W,C) NHWC; w: (C,1,7,7); b: (C,). groups=C, padding=3.

    The halo'd, lane-merged padded sample is passed straight to the kernel;
    the 49 taps are built from VMEM slices (no 49x HBM tap buffer).
    """
    B, H, W, C = x.shape
    xp = jnp.pad(x, ((0, 0), (3, 3), (3, 3), (0, 0)))
    xp = xp.reshape(B, H + 6, (W + 6) * C).astype(jnp.float32)
    # wt[tap, w_pos*C + c] = w[c, tap]; bt[w_pos*C + c] = b[c]
    wt = jnp.tile(w.reshape(C, 49).T, (1, W)).astype(jnp.float32)   # (49, W*C)
    bt = jnp.tile(b, W).reshape(1, W * C).astype(jnp.float32)

    # TODO(synk): strip-tile the H axis with a halo'd manual DMA for very large
    # spatial extents (whole padded sample per step is fine at UNet sizes).
    out = pl.pallas_call(
        partial(_dw_kernel, H=H, W=W, C=C),
        out_shape=jax.ShapeDtypeStruct((B, H, W * C), jnp.float32),
        grid_spec=pltpu.PrefetchScalarGridSpec(
            num_scalar_prefetch=0,
            grid=(B,),
            in_specs=[
                pl.BlockSpec((1, H + 6, (W + 6) * C), lambda bb: (bb, 0, 0)),
                pl.BlockSpec((49, W * C), lambda bb: (0, 0)),
                pl.BlockSpec((1, W * C), lambda bb: (0, 0)),
            ],
            out_specs=pl.BlockSpec((1, H, W * C), lambda bb: (bb, 0, 0)),
        ),
        compiler_params=pltpu.CompilerParams(
            dimension_semantics=("parallel",),
            vmem_limit_bytes=_VMEM_LIMIT),
    )(xp, wt, bt)
    return out.reshape(B, H, W, C)


# ---------------------------------------------------------------------------
# Layer helpers (NHWC; matmuls routed through matmul2d)
# ---------------------------------------------------------------------------

def conv2d(x, w, b=None, stride=1, pad=0, act=None):
    """x: (B,H,W,Cin) NHWC; w: (Cout,Cin,kh,kw) torch layout."""
    B, H, W, Cin = x.shape
    Cout, _, kh, kw = w.shape
    if pad:
        x = jnp.pad(x, ((0, 0), (pad, pad), (pad, pad), (0, 0)))
    Hp, Wp = H + 2 * pad, W + 2 * pad
    Ho = (Hp - kh) // stride + 1
    Wo = (Wp - kw) // stride + 1
    M = B * Ho * Wo

    if kh == 1 and kw == 1 and stride == 1:
        patches = x.reshape(M, Cin)           # pointwise: no im2col at all
    else:
        # bf16 patches when the matmul will run on the MXU (halves the buffer).
        to_bf16 = (M >= _PALLAS_MIN_M and Cout >= _PALLAS_MIN_N)
        xs = x.astype(jnp.bfloat16) if to_bf16 else x
        cols = [xs[:, ky:ky + (Ho - 1) * stride + 1:stride,
                   kx:kx + (Wo - 1) * stride + 1:stride, :]
                for ky in range(kh) for kx in range(kw)]
        # Channel-axis concat keeps C on the lane axis; the reshape is
        # contiguous.
        patches = jnp.concatenate(cols, axis=-1).reshape(M, kh * kw * Cin)
        # TODO(synk): fuse this im2col into the Pallas matmul via a halo'd
        # row-strip DMA so the kh*kw-inflated buffer never round-trips HBM.

    wmat = w.transpose(2, 3, 1, 0).reshape(kh * kw * Cin, Cout)
    out = matmul2d(patches, wmat, bias=b, act=act)
    return out.reshape(B, Ho, Wo, Cout)


def conv_transpose2d(x, w, b):
    """PyTorch ConvTranspose2d(k=4, stride=2, pad=1) as one lane-dense conv.

    The 2x2 sub-pixel output phases become the 4*Cout output channels of a
    single 3x3 convolution whose weight scatters the transposed-conv kernel;
    one reshape/transpose then interleaves the phases.
    x: (B,H,W,Cin); w: (Cin,Cout,4,4); b: (Cout,). Output (B,2H,2W,Cout).
    """
    B, H, W, Cin = x.shape
    Cout = w.shape[1]
    k_map = ((3, 1), (2, 0))   # [phase][tap] -> transposed-conv kernel index
    w_eq = jnp.zeros((4 * Cout, Cin, 3, 3), w.dtype)
    for py in range(2):
        for px in range(2):
            ph = py * 2 + px
            for dy in range(2):
                for dx in range(2):
                    w_eq = w_eq.at[ph * Cout:(ph + 1) * Cout, :,
                                   py + dy, px + dx].set(
                        w[:, :, k_map[py][dy], k_map[px][dx]].T)
    bias_eq = jnp.tile(b, 4)                               # (4*Cout,)
    out = conv2d(x, w_eq, bias_eq, pad=1)                  # (B,H,W,4*Cout)
    out = out.reshape(B, H, W, 2, 2, Cout)
    out = out.transpose(0, 1, 3, 2, 4, 5).reshape(B, 2 * H, 2 * W, Cout)
    return out


def linear(x, w, b):
    return matmul2d(x, w.T, bias=b)


def group_norm(x, w, b, eps=1e-5):
    """GroupNorm(1, C) on NHWC: normalize over (H,W,C) per sample."""
    mean = jnp.mean(x, axis=(1, 2, 3), keepdims=True)
    var = jnp.mean((x - mean) ** 2, axis=(1, 2, 3), keepdims=True)
    xn = (x - mean) * jax.lax.rsqrt(var + eps)
    return xn * w + b


def gelu(x):
    return jax.nn.gelu(x, approximate=False)


def sinusoidal_emb(time, dim):
    half = dim // 2
    c = math.log(10000.0) / (half - 1)
    emb = jnp.exp(jnp.arange(half, dtype=jnp.float32) * -c)
    emb = time[:, None] * emb[None, :]
    return jnp.concatenate([jnp.sin(emb), jnp.cos(emb)], axis=-1)


# ---------------------------------------------------------------------------
# Blocks
# ---------------------------------------------------------------------------

def convnext_block(p, x, t):
    h = depthwise_conv7(x, p['ds']['w'], p['ds']['b'])
    if (p['mlp'] is not None) and (t is not None):
        cond = linear(gelu(t), p['mlp']['w'], p['mlp']['b'])    # (B, dim)
        h = h + cond[:, None, None, :]
    h = group_norm(h, p['gn1']['w'], p['gn1']['b'])
    h = conv2d(h, p['c1']['w'], p['c1']['b'], pad=1, act='gelu')  # GELU fused
    h = group_norm(h, p['gn2']['w'], p['gn2']['b'])
    h = conv2d(h, p['c2']['w'], p['c2']['b'], pad=1)
    res = x if p['res'] is None else conv2d(x, p['res']['w'], p['res']['b'])
    return h + res


def linear_attention(p, x):
    # Tiny head contractions -> plain einsum (XLA fuses them).
    B, H, W, C = x.shape
    n = H * W
    qkv = conv2d(x, p['qkv_w'], None).reshape(B, n, 3 * HIDDEN)
    q, k, v = jnp.split(qkv, 3, axis=-1)
    q = q.reshape(B, n, HEADS, DIM_HEAD)
    k = k.reshape(B, n, HEADS, DIM_HEAD)
    v = v.reshape(B, n, HEADS, DIM_HEAD)
    q = jax.nn.softmax(q, axis=-1) * (DIM_HEAD ** -0.5)   # over dim_head
    k = jax.nn.softmax(k, axis=1)                         # over n
    context = jnp.einsum('bnhd,bnhe->bhde', k, v)
    out = jnp.einsum('bhde,bnhd->bnhe', context, q)
    out = out.reshape(B, H, W, HIDDEN)
    out = conv2d(out, p['out_w'], p['out_b'])
    return group_norm(out, p['gn_w'], p['gn_b'])


def attention(p, x):
    B, H, W, C = x.shape
    n = H * W
    qkv = conv2d(x, p['qkv_w'], None).reshape(B, n, 3 * HIDDEN)
    q, k, v = jnp.split(qkv, 3, axis=-1)
    q = q.reshape(B, n, HEADS, DIM_HEAD) * (DIM_HEAD ** -0.5)
    k = k.reshape(B, n, HEADS, DIM_HEAD)
    v = v.reshape(B, n, HEADS, DIM_HEAD)
    sim = jnp.einsum('bihd,bjhd->bhij', q, k)
    sim = sim - jnp.max(sim, axis=-1, keepdims=True)
    attn = jax.nn.softmax(sim, axis=-1)
    out = jnp.einsum('bhij,bjhd->bihd', attn, v)
    out = out.reshape(B, H, W, HIDDEN)
    return conv2d(out, p['out_w'], p['out_b'])


# ---------------------------------------------------------------------------
# Parameter init (deterministic, synthetic; PyTorch weight layouts)
# ---------------------------------------------------------------------------

class KeyGen:
    def __init__(self, key):
        self.key = key

    def __call__(self):
        self.key, sub = jax.random.split(self.key)
        return sub


def _init_conv(kg, cin, cout, k, bias=True, scale=0.05):
    p = {'w': jax.random.normal(kg(), (cout, cin, k, k), jnp.float32) * scale}
    p['b'] = (jax.random.normal(kg(), (cout,), jnp.float32) * scale
              if bias else None)
    return p


def _init_convT(kg, cin, cout, k, scale=0.05):
    return {'w': jax.random.normal(kg(), (cin, cout, k, k), jnp.float32) * scale,
            'b': jax.random.normal(kg(), (cout,), jnp.float32) * scale}


def _init_linear(kg, fin, fout, scale=0.05):
    return {'w': jax.random.normal(kg(), (fout, fin), jnp.float32) * scale,
            'b': jax.random.normal(kg(), (fout,), jnp.float32) * scale}


def _init_gn(c):
    return {'w': jnp.ones((c,), jnp.float32), 'b': jnp.zeros((c,), jnp.float32)}


def _init_convnext(kg, dim, dim_out, time_dim, mult=2, scale=0.05):
    return {
        'mlp': _init_linear(kg, time_dim, dim) if time_dim is not None else None,
        'ds': {'w': jax.random.normal(kg(), (dim, 1, 7, 7), jnp.float32) * scale,
               'b': jax.random.normal(kg(), (dim,), jnp.float32) * scale},
        'gn1': _init_gn(dim),
        'c1': _init_conv(kg, dim, dim_out * mult, 3),
        'gn2': _init_gn(dim_out * mult),
        'c2': _init_conv(kg, dim_out * mult, dim_out, 3),
        'res': _init_conv(kg, dim, dim_out, 1) if dim != dim_out else None,
    }


def _init_linattn(kg, dim, scale=0.05):
    return {
        'qkv_w': jax.random.normal(kg(), (HIDDEN * 3, dim, 1, 1),
                                   jnp.float32) * scale,
        'out_w': jax.random.normal(kg(), (dim, HIDDEN, 1, 1),
                                   jnp.float32) * scale,
        'out_b': jax.random.normal(kg(), (dim,), jnp.float32) * scale,
        'gn_w': jnp.ones((dim,), jnp.float32),
        'gn_b': jnp.zeros((dim,), jnp.float32),
    }


def _init_attn(kg, dim, scale=0.05):
    return {
        'qkv_w': jax.random.normal(kg(), (HIDDEN * 3, dim, 1, 1),
                                   jnp.float32) * scale,
        'out_w': jax.random.normal(kg(), (dim, HIDDEN, 1, 1),
                                   jnp.float32) * scale,
        'out_b': jax.random.normal(kg(), (dim,), jnp.float32) * scale,
    }


def init_unet_params(key, dim=8, channels=3, dim_mults=(1, 2, 4, 8), mult=2):
    kg = KeyGen(key)
    init_dim = dim // 3 * 2
    dims = [init_dim] + [dim * m for m in dim_mults]
    in_out = list(zip(dims[:-1], dims[1:]))
    time_dim = dim * 4
    n_res = len(in_out)

    P = {'dim': dim}
    P['init_conv'] = _init_conv(kg, channels, init_dim, 7)
    P['time_l1'] = _init_linear(kg, dim, time_dim)
    P['time_l2'] = _init_linear(kg, time_dim, time_dim)

    downs = []
    for ind, (di, do) in enumerate(in_out):
        is_last = ind >= n_res - 1
        downs.append({
            'block1': _init_convnext(kg, di, do, time_dim, mult),
            'block2': _init_convnext(kg, do, do, time_dim, mult),
            'attn_norm': _init_gn(do),
            'attn': _init_linattn(kg, do),
            'down': _init_conv(kg, do, do, 4) if not is_last else None,
        })
    P['downs'] = downs

    mid_dim = dims[-1]
    P['mid1'] = _init_convnext(kg, mid_dim, mid_dim, time_dim, mult)
    P['mid_attn_norm'] = _init_gn(mid_dim)
    P['mid_attn'] = _init_attn(kg, mid_dim)
    P['mid2'] = _init_convnext(kg, mid_dim, mid_dim, time_dim, mult)

    ups = []
    for ind, (di, do) in enumerate(reversed(in_out[1:])):
        is_last = ind >= n_res - 1
        ups.append({
            'block1': _init_convnext(kg, do * 2, di, time_dim, mult),
            'block2': _init_convnext(kg, di, di, time_dim, mult),
            'attn_norm': _init_gn(di),
            'attn': _init_linattn(kg, di),
            'up': _init_convT(kg, di, di, 4) if not is_last else None,
        })
    P['ups'] = ups

    P['final_block'] = _init_convnext(kg, dim, dim, None, mult)
    P['final_conv'] = _init_conv(kg, dim, channels, 1)
    return P


# ---------------------------------------------------------------------------
# UNet forward (module boundary NCHW, internal layout NHWC)
# ---------------------------------------------------------------------------

def unet_forward(P, x, time):
    dim = P['dim']
    x = jnp.transpose(x, (0, 2, 3, 1))            # NCHW -> NHWC

    pad1 = pad2 = 0
    tgt_w = int(2 ** math.ceil(math.log2(x.shape[2])))
    if tgt_w != x.shape[2]:
        pad1 = (tgt_w - x.shape[2]) // 2
        x = jnp.pad(x, ((0, 0), (0, 0), (pad1, pad1), (0, 0)))
    tgt_h = int(2 ** math.ceil(math.log2(x.shape[1])))
    if tgt_h != x.shape[1]:
        pad2 = (tgt_h - x.shape[1]) // 2
        x = jnp.pad(x, ((0, 0), (pad2, pad2), (0, 0), (0, 0)))

    x = conv2d(x, P['init_conv']['w'], P['init_conv']['b'], pad=3)

    t = sinusoidal_emb(time, dim)
    t = linear(t, P['time_l1']['w'], P['time_l1']['b'])
    t = gelu(t)
    t = linear(t, P['time_l2']['w'], P['time_l2']['b'])

    hs = []
    for stage in P['downs']:
        x = convnext_block(stage['block1'], x, t)
        x = convnext_block(stage['block2'], x, t)
        xn = group_norm(x, stage['attn_norm']['w'], stage['attn_norm']['b'])
        x = linear_attention(stage['attn'], xn) + x
        hs.append(x)
        if stage['down'] is not None:
            x = conv2d(x, stage['down']['w'], stage['down']['b'],
                       stride=2, pad=1)

    x = convnext_block(P['mid1'], x, t)
    xn = group_norm(x, P['mid_attn_norm']['w'], P['mid_attn_norm']['b'])
    x = attention(P['mid_attn'], xn) + x
    x = convnext_block(P['mid2'], x, t)

    for stage in P['ups']:
        x = jnp.concatenate([x, hs.pop()], axis=-1)
        x = convnext_block(stage['block1'], x, t)
        x = convnext_block(stage['block2'], x, t)
        xn = group_norm(x, stage['attn_norm']['w'], stage['attn_norm']['b'])
        x = linear_attention(stage['attn'], xn) + x
        if stage['up'] is not None:
            x = conv_transpose2d(x, stage['up']['w'], stage['up']['b'])

    x = convnext_block(P['final_block'], x, None)
    x = conv2d(x, P['final_conv']['w'], P['final_conv']['b'])

    if pad1 != 0:
        x = x[:, :, pad1:-pad1, :]
    if pad2 != 0:
        x = x[:, pad2:-pad2, :, :]
    return jnp.transpose(x, (0, 3, 1, 2))         # NHWC -> NCHW


# ---------------------------------------------------------------------------
# main
# ---------------------------------------------------------------------------

def _selftest_pallas_matmul():
    """Exercise both Pallas matmul variants (the tiny UNet config routes its
    own matmuls to XLA, so verify the MXU kernel explicitly)."""
    # 1) single K step, bias, padded M (390 -> 512), lane-dense N.
    ka, kb = jax.random.split(jax.random.PRNGKey(1))
    A = jax.random.normal(ka, (390, 320), jnp.float32)
    B_ = jax.random.normal(kb, (320, 256), jnp.float32)
    bias = 0.1 * jnp.ones((256,), jnp.float32)
    ref = jnp.dot(A.astype(jnp.bfloat16), B_.astype(jnp.bfloat16),
                  preferred_element_type=jnp.float32) + bias[None, :]
    got = _pallas_matmul(A, B_, bias, None)
    assert got.shape == ref.shape
    assert bool(jnp.allclose(got, ref, atol=1e-1, rtol=1e-2)), "matmul mismatch"

    # 2) multi K step (K=2560 -> 5 x 512), no bias, fused GELU epilogue.
    kc, kd = jax.random.split(jax.random.PRNGKey(2))
    A2 = jax.random.normal(kc, (256, 2560), jnp.float32) * 0.05
    B2 = jax.random.normal(kd, (2560, 128), jnp.float32) * 0.05
    ref2 = _gelu_tanh(jnp.dot(A2.astype(jnp.bfloat16), B2.astype(jnp.bfloat16),
                              preferred_element_type=jnp.float32))
    got2 = _pallas_matmul(A2, B2, None, "gelu")
    assert bool(jnp.allclose(got2, ref2, atol=1e-1, rtol=1e-2)), \
        "matmul+gelu mismatch"


if __name__ == "__main__":
    _selftest_pallas_matmul()

    key = jax.random.PRNGKey(0)
    k_params, k_x = jax.random.split(key)

    DIM, CHANNELS, B, H, W = 8, 3, 2, 16, 16
    params = init_unet_params(k_params, dim=DIM, channels=CHANNELS)

    x = jax.random.normal(k_x, (B, CHANNELS, H, W), jnp.float32)
    time = jnp.arange(B, dtype=jnp.float32) + 1.0

    fwd = jax.jit(partial(unet_forward, params))
    out = jax.block_until_ready(fwd(x, time))

    assert out.shape == (B, CHANNELS, H, W), out.shape
    assert bool(jnp.all(jnp.isfinite(out)))
    print("KERNEL_OK")
</pallas_src>

<mosaic_0001>
module attributes {stable_mosaic.version = 11 : i64} {
  func.func @_mm_kernel(%arg0: i32, %arg1: i32, %arg2: i32, %arg3: memref<128x320xbf16, #tpu.memory_space<vmem>>, %arg4: memref<320x256xbf16, #tpu.memory_space<vmem>>, %arg5: memref<1x256xf32, #tpu.memory_space<vmem>>, %arg6: memref<128x256xf32, #tpu.memory_space<vmem>>) attributes {dimension_semantics = [#tpu.dimension_semantics<parallel>, #tpu.dimension_semantics<parallel>, #tpu.dimension_semantics<arbitrary>], iteration_bounds = array<i64: 4, 1, 1>, scalar_prefetch = 0 : i64, scratch_operands = 0 : i64, tpu.core_type = #tpu.core_type<tc>, window_params = [{transform_indices = @transform_0, window_bounds = array<i64: 128, 320>}, {transform_indices = @transform_1, window_bounds = array<i64: 320, 256>}, {transform_indices = @transform_2, window_bounds = array<i64: 1, 256>}, {transform_indices = @transform_3, window_bounds = array<i64: 128, 256>}]} {
    %c0 = arith.constant 0 : index
    %c0_0 = arith.constant 0 : index
    %0 = vector.load %arg3[%c0, %c0_0] : memref<128x320xbf16, #tpu.memory_space<vmem>>, vector<128x320xbf16>
    %c0_1 = arith.constant 0 : index
    %c0_2 = arith.constant 0 : index
    %1 = vector.load %arg4[%c0_1, %c0_2] : memref<320x256xbf16, #tpu.memory_space<vmem>>, vector<320x256xbf16>
    %cst = arith.constant dense<0.000000e+00> : vector<128x256xf32>
    %2 = tpu.matmul %0, %1, %cst {dimension_numbers = #tpu.dot_dimension_numbers<[1], [0], [0], [1], [0, 0, 1, 1], [], []>} : vector<128x320xbf16>, vector<320x256xbf16>, vector<128x256xf32> -> vector<128x256xf32>
    %c0_3 = arith.constant 0 : index
    %c0_4 = arith.constant 0 : index
    %3 = vector.load %arg5[%c0_3, %c0_4] : memref<1x256xf32, #tpu.memory_space<vmem>>, vector<1x256xf32>
    %4 = vector.broadcast %3 : vector<1x256xf32> to vector<128x256xf32>
    %5 = arith.addf %2, %4 : vector<128x256xf32>
    %c0_5 = arith.constant 0 : index
    %c0_6 = arith.constant 0 : index
    %6 = vector.load %arg6[%c0_5, %c0_6] : memref<128x256xf32, #tpu.memory_space<vmem>>, vector<128x256xf32>
    tpu.vector_store %arg6[%c0_5, %c0_6], %5 {strides = array<i32>} : memref<128x256xf32, #tpu.memory_space<vmem>>, vector<128x256xf32>,
    return
  }
  func.func @transform_0(%arg0: i32, %arg1: i32, %arg2: i32) -> (i32, i32) {
    %c0_i32 = arith.constant 0 : i32
    return %arg0, %arg2 : i32, i32
  }
  func.func @transform_1(%arg0: i32, %arg1: i32, %arg2: i32) -> (i32, i32) {
    %c0_i32 = arith.constant 0 : i32
    return %arg2, %arg1 : i32, i32
  }
  func.func @transform_2(%arg0: i32, %arg1: i32, %arg2: i32) -> (i32, i32) {
    %c0_i32 = arith.constant 0 : i32
    %c0_i32_0 = arith.constant 0 : i32
    return %c0_i32, %arg1 : i32, i32
  }
  func.func @transform_3(%arg0: i32, %arg1: i32, %arg2: i32) -> (i32, i32) {
    %c0_i32 = arith.constant 0 : i32
    return %arg0, %arg1 : i32, i32
  }
}

</mosaic_0001>

<llo_original>
// kernel: tpu_custom_call.1
$region0: #{tpu_custom_call.1}
  #allocation0 [shape = 'u32[]', space=smem, size = 0x4, offset = 0x4, fixed_abs, tag = 'smem constant byte address 0x4 - core index']
  #allocation1 [shape = 'u32[144,128]{1,0:T(1,128)}', space=vmem, size = 0x12000, scoped, tag = 'internal scratch']
  %s0 = inlined_call_operand.vmem [shape: bf16[512,320], index: 0, kind: input, shape index: {}]
  %s1 = inlined_call_operand.vmem [shape: bf16[320,256], index: 1, kind: input, shape index: {}]
  %s2 = inlined_call_operand.vmem [shape: f32[1,256], index: 2, kind: input, shape index: {}]
  %s3 = inlined_call_operand.hbm [shape: f32[512,256], index: 3, kind: output, shape index: {}]
  %s4 = sld [smem:[#allocation0]]
  $region45: #{tpu_custom_call.1} parent=0
    _
  %s6 = ssub.s32 1, %s4
  %s7 = scalar_select 0, %s6, %s4
  $region1: #{tpu_custom_call.1} parent=0
    #allocation2 [shape = 'u8[262144]{0}', space=vmem, size = 0x40000, scoped, tag = 'output window, operand 0']
    #allocation3 [shape = 's32[2]{0}', space=sflag, size = 0x8, scoped, tag = 'scoped memory for tpu_custom_call.1']
    %8 = vsyncpa [#allocation3], 0
    %s9 = scalar_lea.sflag [#allocation3], 1
    %10 = vsyncpa %s9, 0
    loop: start=0, step=1, limit=6
    $region2: #{tpu_custom_call.1} parent=1 // loop_pre_header
      _
    $region3: #{tpu_custom_call.1} parent=1 // loop_header
      %s12 = sphi 0, %s16
      %p13 = scmp.ge.s32.totalorder %s12, 6
      %s19 = sphi 0, %s38
      %s20 = sphi 0, %s34
      %s21 = sphi 0, %s30
      %s22 = sphi 0, %s19
      %s23 = sphi 0, %s20
      %s24 = sphi 0, %s21
      %s25 = sphi 0, %s22
      %s26 = sphi 0, %s23
      %s27 = sphi 0, %s24
      %s43 = sphi 0, %s45
      %s46 = sphi 0, %s43
      %s47 = sphi 0, %s46
      %s63 = sphi 0, %s47
      %s71 = sphi 0, %s73
      %s74 = sphi 0, %s71
      %s75 = sphi 0, %s74
      %s91 = sphi 0, %s75
      %s97 = sphi 0, %s99
      %s100 = sphi 0, %s97
      %s101 = sphi 0, %s100
      %s117 = sphi 0, %s101
      %s125 = sphi 0, %s127
      %s128 = sphi 0, %s125
      %s129 = sphi 0, %s128
      %s145 = sphi 0, %s129
    $region4: #{tpu_custom_call.1} parent=1 // loop_header_branch
      %15 = sbr.rel (%p13) target = $region8
    $region5: #{tpu_custom_call.1} parent=1 // loop_body
      %s17 = ssub.s32 %s12, 1
      %s18 = ssub.s32 %s12, 2
      %s28 = sadd.s32 1, %s21
      %p29 = scmp.ge.s32.totalorder %s28, 1
      %s30 = scalar_select %p29, 0, %s28
      %s31 = sadd.s32 1, %s20
      %s32 = scalar_select %p29, %s31, %s20
      %p33 = scmp.ge.s32.totalorder %s32, 1
      %s34 = scalar_select %p33, 0, %s32
      %s35 = sadd.s32 1, %s19
      %s36 = scalar_select %p33, %s35, %s19
      %p37 = scmp.ge.s32.totalorder %s36, 4
      %s38 = scalar_select %p37, 0, %s36
      %s39 = ssub.s32 %s19, %s38
      %s40 = ssub.s32 %s21, %s30
      %s41 = sor.u32 %s39, %s40
      %p42 = scmp.eq.s32.totalorder %s41, 0
      %s44 = sadd.s32 %s43, 1
      %s45 = scalar_select %p42, %s43, %s44
      %p48 = pneg %p42
      %p49 = scmp.eq.s32.totalorder %s12, 3
      %p50 = por %p48, %p49
      %p51 = scmp.ne.s32.totalorder %s43, %s46
      %p52 = scmp.eq.s32.totalorder %s12, 0
      %p53 = por %p51, %p52
      %p54 = scmp.ne.s32.totalorder %s43, %s46
      %p55 = scmp.eq.s32.totalorder %s17, 3
      %p56 = por %p54, %p55
      %p57 = scmp.ne.s32.totalorder %s46, %s47
      %p58 = scmp.eq.s32.totalorder %s17, 0
      %p59 = por %p57, %p58
      %p60 = scmp.ne.s32.totalorder %s46, %s47
      %p61 = scmp.eq.s32.totalorder %s18, 3
      %p62 = por %p60, %p61
      %p64 = scmp.ne.s32.totalorder %s47, %s63
      %p65 = scmp.eq.s32.totalorder %s18, 0
      %p66 = por %p64, %p65
      %s67 = ssub.s32 %s21, %s30
      %s68 = ssub.s32 %s20, %s34
      %s69 = sor.u32 %s67, %s68
      %p70 = scmp.eq.s32.totalorder %s69, 0
      %s72 = sadd.s32 %s71, 1
      %s73 = scalar_select %p70, %s71, %s72
      %p76 = pneg %p70
      %p77 = scmp.eq.s32.totalorder %s12, 3
      %p78 = por %p76, %p77
      %p79 = scmp.ne.s32.totalorder %s71, %s74
      %p80 = scmp.eq.s32.totalorder %s12, 0
      %p81 = por %p79, %p80
      %p82 = scmp.ne.s32.totalorder %s71, %s74
      %p83 = scmp.eq.s32.totalorder %s17, 3
      %p84 = por %p82, %p83
      %p85 = scmp.ne.s32.totalorder %s74, %s75
      %p86 = scmp.eq.s32.totalorder %s17, 0
      %p87 = por %p85, %p86
      %p88 = scmp.ne.s32.totalorder %s74, %s75
      %p89 = scmp.eq.s32.totalorder %s18, 3
      %p90 = por %p88, %p89
      %p92 = scmp.ne.s32.totalorder %s75, %s91
      %p93 = scmp.eq.s32.totalorder %s18, 0
      %p94 = por %p92, %p93
      %s95 = ssub.s32 %s20, %s34
      %p96 = scmp.eq.s32.totalorder %s95, 0
      %s98 = sadd.s32 %s97, 1
      %s99 = scalar_select %p96, %s97, %s98
      %p102 = pneg %p96
      %p103 = scmp.eq.s32.totalorder %s12, 3
      %p104 = por %p102, %p103
      %p105 = scmp.ne.s32.totalorder %s97, %s100
      %p106 = scmp.eq.s32.totalorder %s12, 0
      %p107 = por %p105, %p106
      %p108 = scmp.ne.s32.totalorder %s97, %s100
      %p109 = scmp.eq.s32.totalorder %s17, 3
      %p110 = por %p108, %p109
      %p111 = scmp.ne.s32.totalorder %s100, %s101
      %p112 = scmp.eq.s32.totalorder %s17, 0
      %p113 = por %p111, %p112
      %p114 = scmp.ne.s32.totalorder %s100, %s101
      %p115 = scmp.eq.s32.totalorder %s18, 3
      %p116 = por %p114, %p115
      %p118 = scmp.ne.s32.totalorder %s101, %s117
      %p119 = scmp.eq.s32.totalorder %s18, 0
      %p120 = por %p118, %p119
      %s121 = ssub.s32 %s19, %s38
      %s122 = ssub.s32 %s20, %s34
      %s123 = sor.u32 %s121, %s122
      %p124 = scmp.eq.s32.totalorder %s123, 0
      %s126 = sadd.s32 %s125, 1
      %s127 = scalar_select %p124, %s125, %s126
      %p130 = pneg %p124
      %p131 = scmp.eq.s32.totalorder %s12, 3
      %p132 = por %p130, %p131
      %p133 = scmp.ne.s32.totalorder %s125, %s128
      %p134 = scmp.eq.s32.totalorder %s12, 0
      %p135 = por %p133, %p134
      %p136 = scmp.ne.s32.totalorder %s125, %s128
      %p137 = scmp.eq.s32.totalorder %s17, 3
      %p138 = por %p136, %p137
      %p139 = scmp.ne.s32.totalorder %s128, %s129
      %p140 = scmp.eq.s32.totalorder %s17, 0
      %p141 = por %p139, %p140
      %p142 = scmp.ne.s32.totalorder %s128, %s129
      %p143 = scmp.eq.s32.totalorder %s18, 3
      %p144 = por %p142, %p143
      %p146 = scmp.ne.s32.totalorder %s129, %s145
      %p147 = scmp.eq.s32.totalorder %s18, 0
      %p148 = por %p146, %p147
      %p149 = scmp.le.s32.totalorder 1, %s12
      %p150 = scmp.lt.s32.totalorder %s12, 5
      %p151 = pnand %p149, %p150
      %p152 = pneg %p151
      // Predicated region
      $region9: #{tpu_custom_call.1} parent=5 // pred_check
        _
      $region10: #{tpu_custom_call.1} parent=5 // pred_check_branch
        %154 = sbr.rel (%p151) target = $region12
      $region11: #{tpu_custom_call.1} parent=5 // pred_region
        %s155 = ssub.s32 %s12, 1
        // Predicated region
        $region13: #{tpu_custom_call.1} parent=11 // pred_check
          %p156 = pneg %p87
        $region14: #{tpu_custom_call.1} parent=11 // pred_check_branch
          %158 = sbr.rel (%p156) target = $region16
        $region15: #{tpu_custom_call.1} parent=11 // pred_region
          %s159 = smul.u32 40, %s24
          %s160 = smul.u32 2, %s23
          %p161 = scmp.lt.s32.totalorder %s159, 39
          %s162 = scalar_select %p161, %s159, 39
          %p163 = scmp.lt.s32.totalorder %s160, 1
          %s164 = scalar_select %p163, %s160, 1
          %s165 = smul.addr %s162, 2
          %s166 = sadd.s32 %s164, %s165
          %s167 = smul.addr %s166, 4
          %s168 = scalar_lea.vmem %s1, %s167
          %s169 = smul.u32 40, %s24
          %s170 = smul.u32 2, %s23
        $region16: #{tpu_custom_call.1} parent=11 // pred_fallthru
          _
        // Predicated region
        $region17: #{tpu_custom_call.1} parent=11 // pred_check
          %p171 = pneg %p113
        $region18: #{tpu_custom_call.1} parent=11 // pred_check_branch
          %173 = sbr.rel (%p171) target = $region20
        $region19: #{tpu_custom_call.1} parent=11 // pred_region
          %s174 = smul.u32 2, %s23
          %p175 = scmp.lt.s32.totalorder %s174, 1
          %s176 = scalar_select %p175, %s174, 1
          %s177 = scalar_lea.vmem %s2, %s176
          %s178 = smul.u32 2, %s23
        $region20: #{tpu_custom_call.1} parent=11 // pred_fallthru
          _
      $region12: #{tpu_custom_call.1} parent=5 // pred_fallthru
        _
      %p179 = scmp.lt.s32.totalorder %s12, 4
      // Predicated region
      $region21: #{tpu_custom_call.1} parent=5 // pred_check
        %p180 = pneg %p179
      $region22: #{tpu_custom_call.1} parent=5 // pred_check_branch
        %182 = sbr.rel (%p180) target = $region24
      $region23: #{tpu_custom_call.1} parent=5 // pred_region
        // Predicated region
        $region25: #{tpu_custom_call.1} parent=23 // pred_check
          %p183 = pneg %p53
        $region26: #{tpu_custom_call.1} parent=23 // pred_check_branch
          %185 = sbr.rel (%p183) target = $region28
        $region27: #{tpu_custom_call.1} parent=23 // pred_region
          %s186 = smul.u32 16, %s19
          %s187 = smul.u32 3, %s21
          %p188 = scmp.lt.s32.totalorder %s186, 63
          %s189 = scalar_select %p188, %s186, 63
          %p190 = scmp.lt.s32.totalorder %s187, 2
          %s191 = scalar_select %p190, %s187, 2
          %s192 = smul.addr %s189, 3
          %s193 = sadd.s32 %s191, %s192
          %s194 = smul.addr %s193, 4
          %s195 = scalar_lea.vmem %s0, %s194
          %s196 = smul.u32 16, %s19
          %s197 = smul.u32 3, %s21
        $region28: #{tpu_custom_call.1} parent=23 // pred_fallthru
          _
      $region24: #{tpu_custom_call.1} parent=5 // pred_fallthru
        _
      %p198 = scmp.le.s32.totalorder 1, %s12
      %p199 = scmp.lt.s32.totalorder %s12, 5
      %p200 = pnand %p198, %p199
      %p201 = pneg %p200
      // Predicated region
      $region29: #{tpu_custom_call.1} parent=5 // pred_check
        _
      $region30: #{tpu_custom_call.1} parent=5 // pred_check_branch
        %203 = sbr.rel (%p200) target = $region32
      $region31: #{tpu_custom_call.1} parent=5 // pred_region
        %s204 = ssub.s32 %s12, 1
        %s205 = smul.u32 16, %s22
        %s206 = smul.u32 3, %s24
        %p207 = scmp.lt.s32.totalorder %s205, 63
        %s208 = scalar_select %p207, %s205, 63
        %p209 = scmp.lt.s32.totalorder %s206, 2
        %s210 = scalar_select %p209, %s206, 2
        %s211 = smul.addr %s208, 3
        %s212 = sadd.s32 %s210, %s211
        %s213 = smul.addr %s212, 4
        %s214 = scalar_lea.vmem %s0, %s213
        %p215 = pneg %p59
        %p216 = pneg %p56
        %s217 = smul.u32 40, %s24
        %s218 = smul.u32 2, %s23
        %p219 = scmp.lt.s32.totalorder %s217, 39
        %s220 = scalar_select %p219, %s217, 39
        %p221 = scmp.lt.s32.totalorder %s218, 1
        %s222 = scalar_select %p221, %s218, 1
        %s223 = smul.addr %s220, 2
        %s224 = sadd.s32 %s222, %s223
        %s225 = smul.addr %s224, 4
        %s226 = scalar_lea.vmem %s1, %s225
        %p227 = pneg %p87
        %p228 = pneg %p84
        %s229 = smul.u32 2, %s23
        %p230 = scmp.lt.s32.totalorder %s229, 1
        %s231 = scalar_select %p230, %s229, 1
        %s232 = scalar_lea.vmem %s2, %s231
        %p233 = pneg %p113
        %p234 = pneg %p110
        %p235 = pneg %p141
        %p236 = pneg %p138
        %s237 = sand.u32 %s128, 1
        %s238 = scalar_lea.sflag [#allocation3], %s237
        %s239 = sand.u32 %s128, 1
        %s240 = smul.addr %s239, 256
        %s241 = scalar_lea.vmem [#allocation2], %s240
        %s242 = smul.u32 16, %s22
        %s243 = smul.u32 3, %s24
        %p244 = scmp.lt.s32.totalorder %s242, 63
        %s245 = scalar_select %p244, %s242, 63
        %p246 = scmp.lt.s32.totalorder %s243, 2
        %s247 = scalar_select %p246, %s243, 2
        %s248 = smul.addr %s245, 3
        %s249 = sadd.s32 %s247, %s248
        %s250 = smul.addr %s249, 4
        %s251 = scalar_lea.vmem %s0, %s250
        %s252 = smul.u32 16, %s22
        %s253 = smul.u32 3, %s24
        %s254 = smul.u32 40, %s24
        %s255 = smul.u32 2, %s23
        %p256 = scmp.lt.s32.totalorder %s254, 39
        %s257 = scalar_select %p256, %s254, 39
        %p258 = scmp.lt.s32.totalorder %s255, 1
        %s259 = scalar_select %p258, %s255, 1
        %s260 = smul.addr %s257, 2
        %s261 = sadd.s32 %s259, %s260
        %s262 = smul.addr %s261, 4
        %s263 = scalar_lea.vmem %s1, %s262
        %s264 = smul.u32 40, %s24
        %s265 = smul.u32 2, %s23
        %s266 = smul.u32 2, %s23
        %p267 = scmp.lt.s32.totalorder %s266, 1
        %s268 = scalar_select %p267, %s266, 1
        %s269 = scalar_lea.vmem %s2, %s268
        %s270 = smul.u32 2, %s23
        %s271 = smul.u32 16, %s22
        %s272 = smul.u32 2, %s23
        %v274 = vld [vmem:[%s251] sm:$0xff]
        %v275 = vld [vmem:[%s251 + $0x8] sm:$0xf]
        %v276 = vld [vmem:[%s251 + $0xc] sm:$0xff]
        %v277 = vld [vmem:[%s251 + $0x14] sm:$0xf]
        %v278 = vld [vmem:[%s251 + $0x18] sm:$0xff]
        %v279 = vld [vmem:[%s251 + $0x20] sm:$0xf]
        %v280 = vld [vmem:[%s251 + $0x24] sm:$0xff]
        %v281 = vld [vmem:[%s251 + $0x2c] sm:$0xf]
        %v282 = vld [vmem:[%s251 + $0x30] sm:$0xff]
        %v283 = vld [vmem:[%s251 + $0x38] sm:$0xf]
        %v284 = vld [vmem:[%s251 + $0x3c] sm:$0xff]
        %v285 = vld [vmem:[%s251 + $0x44] sm:$0xf]
        %v286 = vld [vmem:[%s251 + $0x48] sm:$0xff]
        %v287 = vld [vmem:[%s251 + $0x50] sm:$0xf]
        %v288 = vld [vmem:[%s251 + $0x54] sm:$0xff]
        %v289 = vld [vmem:[%s251 + $0x5c] sm:$0xf]
        %v290 = vld [vmem:[%s251 + $0x60] sm:$0xff]
        %v291 = vld [vmem:[%s251 + $0x68] sm:$0xf]
        %v292 = vld [vmem:[%s251 + $0x6c] sm:$0xff]
        %v293 = vld [vmem:[%s251 + $0x74] sm:$0xf]
        %v294 = vld [vmem:[%s251 + $0x78] sm:$0xff]
        %v295 = vld [vmem:[%s251 + $0x80] sm:$0xf]
        %v296 = vld [vmem:[%s251 + $0x84] sm:$0xff]
        %v297 = vld [vmem:[%s251 + $0x8c] sm:$0xf]
        %v298 = vld [vmem:[%s251 + $0x90] sm:$0xff]
        %v299 = vld [vmem:[%s251 + $0x98] sm:$0xf]
        %v300 = vld [vmem:[%s251 + $0x9c] sm:$0xff]
        %v301 = vld [vmem:[%s251 + $0xa4] sm:$0xf]
        %v302 = vld [vmem:[%s251 + $0xa8] sm:$0xff]
        %v303 = vld [vmem:[%s251 + $0xb0] sm:$0xf]
        %v304 = vld [vmem:[%s251 + $0xb4] sm:$0xff]
        %v305 = vld [vmem:[%s251 + $0xbc] sm:$0xf]
        %v306 = vld [vmem:[%s263] sm:$0xff]
        %v307 = vld [vmem:[%s263 + $0x8] sm:$0xff]
        %v308 = vld [vmem:[%s263 + $0x10] sm:$0xff]
        %v309 = vld [vmem:[%s263 + $0x18] sm:$0xff]
        %v310 = vld [vmem:[%s263 + $0x20] sm:$0xff]
        %v311 = vld [vmem:[%s263 + $0x28] sm:$0xff]
        %v312 = vld [vmem:[%s263 + $0x30] sm:$0xff]
        %v313 = vld [vmem:[%s263 + $0x38] sm:$0xff]
        %v314 = vld [vmem:[%s263 + $0x40] sm:$0xff]
        %v315 = vld [vmem:[%s263 + $0x48] sm:$0xff]
        %v316 = vld [vmem:[%s263 + $0x50] sm:$0xff]
        %v317 = vld [vmem:[%s263 + $0x58] sm:$0xff]
        %v318 = vld [vmem:[%s263 + $0x60] sm:$0xff]
        %v319 = vld [vmem:[%s263 + $0x68] sm:$0xff]
        %v320 = vld [vmem:[%s263 + $0x70] sm:$0xff]
        %v321 = vld [vmem:[%s263 + $0x78] sm:$0xff]
        %v322 = vld [vmem:[%s263 + $0x80] sm:$0xff]
        %v323 = vld [vmem:[%s263 + $0x88] sm:$0xff]
        %v324 = vld [vmem:[%s263 + $0x90] sm:$0xff]
        %v325 = vld [vmem:[%s263 + $0x98] sm:$0xff]
        %v326 = vld [vmem:[%s263 + $0xa0] sm:$0xff]
        %v327 = vld [vmem:[%s263 + $0xa8] sm:$0xff]
        %v328 = vld [vmem:[%s263 + $0xb0] sm:$0xff]
        %v329 = vld [vmem:[%s263 + $0xb8] sm:$0xff]
        %v330 = vld [vmem:[%s263 + $0xc0] sm:$0xff]
        %v331 = vld [vmem:[%s263 + $0xc8] sm:$0xff]
        %v332 = vld [vmem:[%s263 + $0xd0] sm:$0xff]
        %v333 = vld [vmem:[%s263 + $0xd8] sm:$0xff]
        %v334 = vld [vmem:[%s263 + $0xe0] sm:$0xff]
        %v335 = vld [vmem:[%s263 + $0xe8] sm:$0xff]
        %v336 = vld [vmem:[%s263 + $0xf0] sm:$0xff]
        %v337 = vld [vmem:[%s263 + $0xf8] sm:$0xff]
        %v338 = vld [vmem:[%s263 + $0x100] sm:$0xff]
        %v339 = vld [vmem:[%s263 + $0x108] sm:$0xff]
        %v340 = vld [vmem:[%s263 + $0x110] sm:$0xff]
        %v341 = vld [vmem:[%s263 + $0x118] sm:$0xff]
        %v342 = vld [vmem:[%s263 + $0x120] sm:$0xff]
        %v343 = vld [vmem:[%s263 + $0x128] sm:$0xff]
        %v344 = vld [vmem:[%s263 + $0x130] sm:$0xff]
        %v345 = vld [vmem:[%s263 + $0x138] sm:$0xff]
        %v346 = vld [vmem:[%s269] sm:$0x3]
        %v348 = vlaneseq
        %v349 = vshrl.u32 %v348, 7
        %v350 = vsub.s32 0, %v349
        %v351 = vrot.slane %v346, %v350
        %v352 = vlaneseq
        %v353 = vshrl.u32 %v352, 7
        %v354 = vsub.s32 1, %v353
        %v355 = vrot.slane %v346, %v354
        %v390 = vunpack.c.l.b16 %v274
        %v391 = vunpack.c.h.b16 %v274
        %v392 = vunpack.c.l.b16 %v275
        %v393 = vunpack.c.l.b16 %v276
        %v394 = vunpack.c.h.b16 %v276
        %v395 = vunpack.c.l.b16 %v277
        %v396 = vunpack.c.l.b16 %v278
        %v397 = vunpack.c.h.b16 %v278
        %v398 = vunpack.c.l.b16 %v279
        %v399 = vunpack.c.l.b16 %v280
        %v400 = vunpack.c.h.b16 %v280
        %v401 = vunpack.c.l.b16 %v281
        %v402 = vunpack.c.l.b16 %v282
        %v403 = vunpack.c.h.b16 %v282
        %v404 = vunpack.c.l.b16 %v283
        %v405 = vunpack.c.l.b16 %v284
        %v406 = vunpack.c.h.b16 %v284
        %v407 = vunpack.c.l.b16 %v285
        %v408 = vunpack.c.l.b16 %v286
        %v409 = vunpack.c.h.b16 %v286
        %v410 = vunpack.c.l.b16 %v287
        %v411 = vunpack.c.l.b16 %v288
        %v412 = vunpack.c.h.b16 %v288
        %v413 = vunpack.c.l.b16 %v289
        %v414 = vunpack.c.l.b16 %v290
        %v415 = vunpack.c.h.b16 %v290
        %v416 = vunpack.c.l.b16 %v291
        %v417 = vunpack.c.l.b16 %v292
        %v418 = vunpack.c.h.b16 %v292
        %v419 = vunpack.c.l.b16 %v293
        %v420 = vunpack.c.l.b16 %v294
        %v421 = vunpack.c.h.b16 %v294
        %v422 = vunpack.c.l.b16 %v295
        %v423 = vunpack.c.l.b16 %v296
        %v424 = vunpack.c.h.b16 %v296
        %v425 = vunpack.c.l.b16 %v297
        %v426 = vunpack.c.l.b16 %v298
        %v427 = vunpack.c.h.b16 %v298
        %v428 = vunpack.c.l.b16 %v299
        %v429 = vunpack.c.l.b16 %v300
        %v430 = vunpack.c.h.b16 %v300
        %v431 = vunpack.c.l.b16 %v301
        %v432 = vunpack.c.l.b16 %v302
        %v433 = vunpack.c.h.b16 %v302
        %v434 = vunpack.c.l.b16 %v303
        %v435 = vunpack.c.l.b16 %v304
        %v436 = vunpack.c.h.b16 %v304
        %v437 = vunpack.c.l.b16 %v305
        %v438 = vpack.c.b16 %v393, %v390
        %v439 = vpack.c.b16 %v394, %v391
        %v440 = vpack.c.b16 %v395, %v392
        %v441 = vpack.c.b16 %v399, %v396
        %v442 = vpack.c.b16 %v400, %v397
        %v443 = vpack.c.b16 %v401, %v398
        %v444 = vpack.c.b16 %v405, %v402
        %v445 = vpack.c.b16 %v406, %v403
        %v446 = vpack.c.b16 %v407, %v404
        %v447 = vpack.c.b16 %v411, %v408
        %v448 = vpack.c.b16 %v412, %v409
        %v449 = vpack.c.b16 %v413, %v410
        %v450 = vpack.c.b16 %v417, %v414
        %v451 = vpack.c.b16 %v418, %v415
        %v452 = vpack.c.b16 %v419, %v416
        %v453 = vpack.c.b16 %v423, %v420
        %v454 = vpack.c.b16 %v424, %v421
        %v455 = vpack.c.b16 %v425, %v422
        %v456 = vpack.c.b16 %v429, %v426
        %v457 = vpack.c.b16 %v430, %v427
        %v458 = vpack.c.b16 %v431, %v428
        %v459 = vpack.c.b16 %v435, %v432
        %v460 = vpack.c.b16 %v436, %v433
        %v461 = vpack.c.b16 %v437, %v434
        %v518 = vunpack.c.l.b16 %v306
        %v519 = vunpack.c.h.b16 %v306
        %v520 = vunpack.c.l.b16 %v307
        %v521 = vunpack.c.h.b16 %v307
        %v522 = vunpack.c.l.b16 %v308
        %v523 = vunpack.c.h.b16 %v308
        %v524 = vunpack.c.l.b16 %v309
        %v525 = vunpack.c.h.b16 %v309
        %v526 = vunpack.c.l.b16 %v310
        %v527 = vunpack.c.h.b16 %v310
        %v528 = vunpack.c.l.b16 %v311
        %v529 = vunpack.c.h.b16 %v311
        %v530 = vunpack.c.l.b16 %v312
        %v531 = vunpack.c.h.b16 %v312
        %v532 = vunpack.c.l.b16 %v313
        %v533 = vunpack.c.h.b16 %v313
        %v534 = vunpack.c.l.b16 %v314
        %v535 = vunpack.c.h.b16 %v314
        %v536 = vunpack.c.l.b16 %v315
        %v537 = vunpack.c.h.b16 %v315
        %v538 = vunpack.c.l.b16 %v316
        %v539 = vunpack.c.h.b16 %v316
        %v540 = vunpack.c.l.b16 %v317
        %v541 = vunpack.c.h.b16 %v317
        %v542 = vunpack.c.l.b16 %v318
        %v543 = vunpack.c.h.b16 %v318
        %v544 = vunpack.c.l.b16 %v319
        %v545 = vunpack.c.h.b16 %v319
        %v546 = vunpack.c.l.b16 %v320
        %v547 = vunpack.c.h.b16 %v320
        %v548 = vunpack.c.l.b16 %v321
        %v549 = vunpack.c.h.b16 %v321
        %v550 = vunpack.c.l.b16 %v322
        %v551 = vunpack.c.h.b16 %v322
        %v552 = vunpack.c.l.b16 %v323
        %v553 = vunpack.c.h.b16 %v323
        %v554 = vunpack.c.l.b16 %v324
        %v555 = vunpack.c.h.b16 %v324
        %v556 = vunpack.c.l.b16 %v325
        %v557 = vunpack.c.h.b16 %v325
        %v558 = vunpack.c.l.b16 %v326
        %v559 = vunpack.c.h.b16 %v326
        %v560 = vunpack.c.l.b16 %v327
        %v561 = vunpack.c.h.b16 %v327
        %v562 = vunpack.c.l.b16 %v328
        %v563 = vunpack.c.h.b16 %v328
        %v564 = vunpack.c.l.b16 %v329
        %v565 = vunpack.c.h.b16 %v329
        %v566 = vunpack.c.l.b16 %v330
        %v567 = vunpack.c.h.b16 %v330
        %v568 = vunpack.c.l.b16 %v331
        %v569 = vunpack.c.h.b16 %v331
        %v570 = vunpack.c.l.b16 %v332
        %v571 = vunpack.c.h.b16 %v332
        %v572 = vunpack.c.l.b16 %v333
        %v573 = vunpack.c.h.b16 %v333
        %v574 = vunpack.c.l.b16 %v334
        %v575 = vunpack.c.h.b16 %v334
        %v576 = vunpack.c.l.b16 %v335
        %v577 = vunpack.c.h.b16 %v335
        %v578 = vunpack.c.l.b16 %v336
        %v579 = vunpack.c.h.b16 %v336
        %v580 = vunpack.c.l.b16 %v337
        %v581 = vunpack.c.h.b16 %v337
        %v582 = vunpack.c.l.b16 %v338
        %v583 = vunpack.c.h.b16 %v338
        %v584 = vunpack.c.l.b16 %v339
        %v585 = vunpack.c.h.b16 %v339
        %v586 = vunpack.c.l.b16 %v340
        %v587 = vunpack.c.h.b16 %v340
        %v588 = vunpack.c.l.b16 %v341
        %v589 = vunpack.c.h.b16 %v341
        %v590 = vunpack.c.l.b16 %v342
        %v591 = vunpack.c.h.b16 %v342
        %v592 = vunpack.c.l.b16 %v343
        %v593 = vunpack.c.h.b16 %v343
        %v594 = vunpack.c.l.b16 %v344
        %v595 = vunpack.c.h.b16 %v344
        %v596 = vunpack.c.l.b16 %v345
        %v597 = vunpack.c.h.b16 %v345
        %v598 = vpack.c.b16 %v520, %v518
        %v599 = vpack.c.b16 %v521, %v519
        %v600 = vpack.c.b16 %v524, %v522
        %v601 = vpack.c.b16 %v525, %v523
        %v602 = vpack.c.b16 %v528, %v526
        %v603 = vpack.c.b16 %v529, %v527
        %v604 = vpack.c.b16 %v532, %v530
        %v605 = vpack.c.b16 %v533, %v531
        %v606 = vpack.c.b16 %v536, %v534
        %v607 = vpack.c.b16 %v537, %v535
        %v608 = vpack.c.b16 %v540, %v538
        %v609 = vpack.c.b16 %v541, %v539
        %v610 = vpack.c.b16 %v544, %v542
        %v611 = vpack.c.b16 %v545, %v543
        %v612 = vpack.c.b16 %v548, %v546
        %v613 = vpack.c.b16 %v549, %v547
        %v614 = vpack.c.b16 %v552, %v550
        %v615 = vpack.c.b16 %v553, %v551
        %v616 = vpack.c.b16 %v556, %v554
        %v617 = vpack.c.b16 %v557, %v555
        %v618 = vpack.c.b16 %v560, %v558
        %v619 = vpack.c.b16 %v561, %v559
        %v620 = vpack.c.b16 %v564, %v562
        %v621 = vpack.c.b16 %v565, %v563
        %v622 = vpack.c.b16 %v568, %v566
        %v623 = vpack.c.b16 %v569, %v567
        %v624 = vpack.c.b16 %v572, %v570
        %v625 = vpack.c.b16 %v573, %v571
        %v626 = vpack.c.b16 %v576, %v574
        %v627 = vpack.c.b16 %v577, %v575
        %v628 = vpack.c.b16 %v580, %v578
        %v629 = vpack.c.b16 %v581, %v579
        %v630 = vpack.c.b16 %v584, %v582
        %v631 = vpack.c.b16 %v585, %v583
        %v632 = vpack.c.b16 %v588, %v586
        %v633 = vpack.c.b16 %v589, %v587
        %v634 = vpack.c.b16 %v592, %v590
        %v635 = vpack.c.b16 %v593, %v591
        %v636 = vpack.c.b16 %v596, %v594
        %v637 = vpack.c.b16 %v597, %v595
        %vm678 = vcmask 523264
        %v680 = vsel %vm678, %v440, 0
        %v683 = vsel %vm678, %v443, 0
        %v686 = vsel %vm678, %v446, 0
        %v689 = vsel %vm678, %v449, 0
        %v692 = vsel %vm678, %v452, 0
        %v695 = vsel %vm678, %v455, 0
        %v698 = vsel %vm678, %v458, 0
        %v701 = vsel %vm678, %v461, 0
        %703 = vmatprep.subr.bf16.mxu0 %v599
        %704 = vmatpush1.bf16.msra.mxu0 %v598
        %705 = vmatprep.subr.bf16.mxu0 %v601
        %706 = vmatpush1.bf16.msra.mxu0 %v600
        %707 = vmatprep.subr.bf16.mxu0 %v603
        %708 = vmatpush1.bf16.msra.mxu0 %v602
        %709 = vmatprep.subr.bf16.mxu0 %v605
        %710 = vmatpush1.bf16.msra.mxu0 %v604
        %711 = vmatprep.subr.bf16.mxu0 %v607
        %712 = vmatpush1.bf16.msra.mxu0 %v606
        %713 = vmatprep.subr.bf16.mxu0 %v609
        %714 = vmatpush1.bf16.msra.mxu0 %v608
        %715 = vmatprep.subr.bf16.mxu0 %v611
        %716 = vmatpush1.bf16.msra.mxu0 %v610
        %717 = vmatprep.subr.bf16.mxu0 %v613
        %718 = vmatpush1.bf16.msra.mxu0 %v612
        %719 = vmatprep.subr.bf16.mxu0 %v615
        %720 = vmatpush1.bf16.msra.mxu0 %v614
        %721 = vmatprep.subr.bf16.mxu0 %v617
        %722 = vmatpush1.bf16.msra.mxu0 %v616
        %723 = vmatprep.subr.bf16.mxu0 %v619
        %724 = vmatpush1.bf16.msra.mxu0 %v618
        %725 = vmatprep.subr.bf16.mxu0 %v621
        %726 = vmatpush1.bf16.msra.mxu0 %v620
        %727 = vmatprep.subr.bf16.mxu0 %v623
        %728 = vmatpush1.bf16.msra.mxu0 %v622
        %729 = vmatprep.subr.bf16.mxu0 %v625
        %730 = vmatpush1.bf16.msra.mxu0 %v624
        %731 = vmatprep.subr.bf16.mxu0 %v627
        %732 = vmatpush1.bf16.msra.mxu0 %v626
        %733 = vmatprep.subr.bf16.mxu0 %v629
        %734 = vmatpush1.bf16.msra.mxu0 %v628
        %735 = vmatprep.mubr.bf16.mxu0 %v439
        %736 = vmatmul.mubr.bf16.gmra.mrb[0].mxu0 %v438
        %v737 = vpop.f32.mrb[0].mxu0
        %v738 = vadd.f32 %v351, %v737
        %v739 = vpop.f32.mrb[0].mxu0
        %v740 = vadd.f32 %v355, %v739
        %v741 = vpop.f32.mrb[0].mxu0
        %v742 = vadd.f32 %v351, %v741
        %v743 = vpop.f32.mrb[0].mxu0
        %v744 = vadd.f32 %v355, %v743
        %745 = vmatprep.mubr.bf16.mxu0 %v442
        %746 = vmatmul.mubr.bf16.gmra.mrb[0].mxu0 %v441
        %v747 = vpop.f32.mrb[0].mxu0
        %v748 = vadd.f32 %v351, %v747
        %v749 = vpop.f32.mrb[0].mxu0
        %v750 = vadd.f32 %v355, %v749
        %v751 = vpop.f32.mrb[0].mxu0
        %v752 = vadd.f32 %v351, %v751
        %v753 = vpop.f32.mrb[0].mxu0
        %v754 = vadd.f32 %v355, %v753
        %755 = vmatprep.mubr.bf16.mxu0 %v445
        %756 = vmatmul.mubr.bf16.gmra.mrb[0].mxu0 %v444
        %v757 = vpop.f32.mrb[0].mxu0
        %v758 = vadd.f32 %v351, %v757
        %v759 = vpop.f32.mrb[0].mxu0
        %v760 = vadd.f32 %v355, %v759
        %v761 = vpop.f32.mrb[0].mxu0
        %v762 = vadd.f32 %v351, %v761
        %v763 = vpop.f32.mrb[0].mxu0
        %v764 = vadd.f32 %v355, %v763
        %765 = vmatprep.mubr.bf16.mxu0 %v448
        %766 = vmatmul.mubr.bf16.gmra.mrb[0].mxu0 %v447
        %v767 = vpop.f32.mrb[0].mxu0
        %v768 = vadd.f32 %v351, %v767
        %v769 = vpop.f32.mrb[0].mxu0
        %v770 = vadd.f32 %v355, %v769
        %v771 = vpop.f32.mrb[0].mxu0
        %v772 = vadd.f32 %v351, %v771
        %v773 = vpop.f32.mrb[0].mxu0
        %v774 = vadd.f32 %v355, %v773
        %775 = vmatprep.mubr.bf16.mxu0 %v451
        %776 = vmatmul.mubr.bf16.gmra.mrb[0].mxu0 %v450
        %v777 = vpop.f32.mrb[0].mxu0
        %v778 = vadd.f32 %v351, %v777
        %v779 = vpop.f32.mrb[0].mxu0
        %v780 = vadd.f32 %v355, %v779
        %v781 = vpop.f32.mrb[0].mxu0
        %v782 = vadd.f32 %v351, %v781
        %v783 = vpop.f32.mrb[0].mxu0
        %v784 = vadd.f32 %v355, %v783
        %785 = vmatprep.mubr.bf16.mxu0 %v454
        %786 = vmatmul.mubr.bf16.gmra.mrb[0].mxu0 %v453
        %v787 = vpop.f32.mrb[0].mxu0
        %v788 = vadd.f32 %v351, %v787
        %v789 = vpop.f32.mrb[0].mxu0
        %v790 = vadd.f32 %v355, %v789
        %v791 = vpop.f32.mrb[0].mxu0
        %v792 = vadd.f32 %v351, %v791
        %v793 = vpop.f32.mrb[0].mxu0
        %v794 = vadd.f32 %v355, %v793
        %795 = vmatprep.mubr.bf16.mxu0 %v457
        %796 = vmatmul.mubr.bf16.gmra.mrb[0].mxu0 %v456
        %v797 = vpop.f32.mrb[0].mxu0
        %v798 = vadd.f32 %v351, %v797
        %v799 = vpop.f32.mrb[0].mxu0
        %v800 = vadd.f32 %v355, %v799
        %v801 = vpop.f32.mrb[0].mxu0
        %v802 = vadd.f32 %v351, %v801
        %v803 = vpop.f32.mrb[0].mxu0
        %v804 = vadd.f32 %v355, %v803
        %805 = vmatprep.mubr.bf16.mxu0 %v460
        %806 = vmatmul.mubr.bf16.gmra.mrb[0].mxu0 %v459
        %v807 = vpop.f32.mrb[0].mxu0
        %v808 = vadd.f32 %v351, %v807
        %v809 = vpop.f32.mrb[0].mxu0
        %v810 = vadd.f32 %v355, %v809
        %v811 = vpop.f32.mrb[0].mxu0
        %v812 = vadd.f32 %v351, %v811
        %v813 = vpop.f32.mrb[0].mxu0
        %v814 = vadd.f32 %v355, %v813
        %815 = vdwg.mxu0
        %816 = vmatprep.subr.bf16.mxu0 %v631
        %817 = vmatpush1.bf16.msra.mxu0 %v630
        %818 = vmatprep.subr.bf16.mxu0 %v633
        %819 = vmatpush1.bf16.msra.mxu0 %v632
        %820 = vmatprep.subr.bf16.mxu0 %v635
        %821 = vmatpush1.bf16.msra.mxu0 %v634
        %822 = vmatprep.subr.bf16.mxu0 %v637
        %823 = vmatpush1.bf16.msra.mxu0 %v636
        %824 = vmatprep.subr.bf16.mxu0 0
        %825 = vmatpush1.bf16.msra.mxu0 0
        %826 = vmatprep.subr.bf16.mxu0 0
        %827 = vmatpush1.bf16.msra.mxu0 0
        %828 = vmatprep.subr.bf16.mxu0 0
        %829 = vmatpush1.bf16.msra.mxu0 0
        %830 = vmatprep.subr.bf16.mxu0 0
        %831 = vmatpush1.bf16.msra.mxu0 0
        %832 = vmatprep.subr.bf16.mxu0 0
        %833 = vmatpush1.bf16.msra.mxu0 0
        %834 = vmatprep.subr.bf16.mxu0 0
        %835 = vmatpush1.bf16.msra.mxu0 0
        %836 = vmatprep.subr.bf16.mxu0 0
        %837 = vmatpush1.bf16.msra.mxu0 0
        %838 = vmatprep.subr.bf16.mxu0 0
        %839 = vmatpush1.bf16.msra.mxu0 0
        %840 = vmatprep.subr.bf16.mxu0 0
        %841 = vmatpush1.bf16.msra.mxu0 0
        %842 = vmatprep.subr.bf16.mxu0 0
        %843 = vmatpush1.bf16.msra.mxu0 0
        %844 = vmatprep.subr.bf16.mxu0 0
        %845 = vmatpush1.bf16.msra.mxu0 0
        %846 = vmatprep.subr.bf16.mxu0 0
        %847 = vmatpush1.bf16.msra.mxu0 0
        %848 = vmatprep.mubr.bf16.mxu0 0
        %849 = vmatmul.mubr.bf16.gmra.mrb[0].mxu0 %v680
        %v850 = vpop.f32.mrb[0].mxu0
        %v851 = vadd.f32 %v738, %v850
        %v852 = vpop.f32.mrb[0].mxu0
        %v853 = vadd.f32 %v740, %v852
        %v854 = vpop.f32.mrb[0].mxu0
        %v855 = vadd.f32 %v742, %v854
        %v856 = vpop.f32.mrb[0].mxu0
        %v857 = vadd.f32 %v744, %v856
        %858 = vmatprep.mubr.bf16.mxu0 0
        %859 = vmatmul.mubr.bf16.gmra.mrb[0].mxu0 %v683
        %v860 = vpop.f32.mrb[0].mxu0
        %v861 = vadd.f32 %v748, %v860
        %v862 = vpop.f32.mrb[0].mxu0
        %v863 = vadd.f32 %v750, %v862
        %v864 = vpop.f32.mrb[0].mxu0
        %v865 = vadd.f32 %v752, %v864
        %v866 = vpop.f32.mrb[0].mxu0
        %v867 = vadd.f32 %v754, %v866
        %868 = vmatprep.mubr.bf16.mxu0 0
        %869 = vmatmul.mubr.bf16.gmra.mrb[0].mxu0 %v686
        %v870 = vpop.f32.mrb[0].mxu0
        %v871 = vadd.f32 %v758, %v870
        %v872 = vpop.f32.mrb[0].mxu0
        %v873 = vadd.f32 %v760, %v872
        %v874 = vpop.f32.mrb[0].mxu0
        %v875 = vadd.f32 %v762, %v874
        %v876 = vpop.f32.mrb[0].mxu0
        %v877 = vadd.f32 %v764, %v876
        %878 = vmatprep.mubr.bf16.mxu0 0
        %879 = vmatmul.mubr.bf16.gmra.mrb[0].mxu0 %v689
        %v880 = vpop.f32.mrb[0].mxu0
        %v881 = vadd.f32 %v768, %v880
        %v882 = vpop.f32.mrb[0].mxu0
        %v883 = vadd.f32 %v770, %v882
        %v884 = vpop.f32.mrb[0].mxu0
        %v885 = vadd.f32 %v772, %v884
        %v886 = vpop.f32.mrb[0].mxu0
        %v887 = vadd.f32 %v774, %v886
        %888 = vmatprep.mubr.bf16.mxu0 0
        %889 = vmatmul.mubr.bf16.gmra.mrb[0].mxu0 %v692
        %v890 = vpop.f32.mrb[0].mxu0
        %v891 = vadd.f32 %v778, %v890
        %v892 = vpop.f32.mrb[0].mxu0
        %v893 = vadd.f32 %v780, %v892
        %v894 = vpop.f32.mrb[0].mxu0
        %v895 = vadd.f32 %v782, %v894
        %v896 = vpop.f32.mrb[0].mxu0
        %v897 = vadd.f32 %v784, %v896
        %898 = vmatprep.mubr.bf16.mxu0 0
        %899 = vmatmul.mubr.bf16.gmra.mrb[0].mxu0 %v695
        %v900 = vpop.f32.mrb[0].mxu0
        %v901 = vadd.f32 %v788, %v900
        %v902 = vpop.f32.mrb[0].mxu0
        %v903 = vadd.f32 %v790, %v902
        %v904 = vpop.f32.mrb[0].mxu0
        %v905 = vadd.f32 %v792, %v904
        %v906 = vpop.f32.mrb[0].mxu0
        %v907 = vadd.f32 %v794, %v906
        %908 = vmatprep.mubr.bf16.mxu0 0
        %909 = vmatmul.mubr.bf16.gmra.mrb[0].mxu0 %v698
        %v910 = vpop.f32.mrb[0].mxu0
        %v911 = vadd.f32 %v798, %v910
        %v912 = vpop.f32.mrb[0].mxu0
        %v913 = vadd.f32 %v800, %v912
        %v914 = vpop.f32.mrb[0].mxu0
        %v915 = vadd.f32 %v802, %v914
        %v916 = vpop.f32.mrb[0].mxu0
        %v917 = vadd.f32 %v804, %v916
        %918 = vmatprep.mubr.bf16.mxu0 0
        %919 = vmatmul.mubr.bf16.gmra.mrb[0].mxu0 %v701
        %v920 = vpop.f32.mrb[0].mxu0
        %v921 = vadd.f32 %v808, %v920
        %v922 = vpop.f32.mrb[0].mxu0
        %v923 = vadd.f32 %v810, %v922
        %v924 = vpop.f32.mrb[0].mxu0
        %v925 = vadd.f32 %v812, %v924
        %v926 = vpop.f32.mrb[0].mxu0
        %v927 = vadd.f32 %v814, %v926
        %928 = vdwg.mxu0
        %929 = vst [vmem:[%s241] sm:$0xff] %v851
        %930 = vst [vmem:[%s241 + $0x8] sm:$0xff] %v853
        %931 = vst [vmem:[%s241 + $0x10] sm:$0xff] %v855
        %932 = vst [vmem:[%s241 + $0x18] sm:$0xff] %v857
        %933 = vst [vmem:[%s241 + $0x20] sm:$0xff] %v861
        %934 = vst [vmem:[%s241 + $0x28] sm:$0xff] %v863
        %935 = vst [vmem:[%s241 + $0x30] sm:$0xff] %v865
        %936 = vst [vmem:[%s241 + $0x38] sm:$0xff] %v867
        %937 = vst [vmem:[%s241 + $0x40] sm:$0xff] %v871
        %938 = vst [vmem:[%s241 + $0x48] sm:$0xff] %v873
        %939 = vst [vmem:[%s241 + $0x50] sm:$0xff] %v875
        %940 = vst [vmem:[%s241 + $0x58] sm:$0xff] %v877
        %941 = vst [vmem:[%s241 + $0x60] sm:$0xff] %v881
        %942 = vst [vmem:[%s241 + $0x68] sm:$0xff] %v883
        %943 = vst [vmem:[%s241 + $0x70] sm:$0xff] %v885
        %944 = vst [vmem:[%s241 + $0x78] sm:$0xff] %v887
        %945 = vst [vmem:[%s241 + $0x80] sm:$0xff] %v891
        %946 = vst [vmem:[%s241 + $0x88] sm:$0xff] %v893
        %947 = vst [vmem:[%s241 + $0x90] sm:$0xff] %v895
        %948 = vst [vmem:[%s241 + $0x98] sm:$0xff] %v897
        %949 = vst [vmem:[%s241 + $0xa0] sm:$0xff] %v901
        %950 = vst [vmem:[%s241 + $0xa8] sm:$0xff] %v903
        %951 = vst [vmem:[%s241 + $0xb0] sm:$0xff] %v905
        %952 = vst [vmem:[%s241 + $0xb8] sm:$0xff] %v907
        %953 = vst [vmem:[%s241 + $0xc0] sm:$0xff] %v911
        %954 = vst [vmem:[%s241 + $0xc8] sm:$0xff] %v913
        %955 = vst [vmem:[%s241 + $0xd0] sm:$0xff] %v915
        %956 = vst [vmem:[%s241 + $0xd8] sm:$0xff] %v917
        %957 = vst [vmem:[%s241 + $0xe0] sm:$0xff] %v921
        %958 = vst [vmem:[%s241 + $0xe8] sm:$0xff] %v923
        %959 = vst [vmem:[%s241 + $0xf0] sm:$0xff] %v925
        %960 = vst [vmem:[%s241 + $0xf8] sm:$0xff] %v927
        %s961 = sand.u32 %s128, 1
        %s962 = scalar_lea.sflag [#allocation3], %s961
        %s963 = sand.u32 %s128, 1
        %s964 = smul.addr %s963, 256
        %s965 = scalar_lea.vmem [#allocation2], %s964
        // Predicated region
        $region33: #{tpu_custom_call.1} parent=31 // pred_check
          %p966 = pneg %p138
        $region34: #{tpu_custom_call.1} parent=31 // pred_check_branch
          %968 = sbr.rel (%p966) target = $region36
        $region35: #{tpu_custom_call.1} parent=31 // pred_region
          %s969 = smul.u32 16, %s22
          %s970 = smul.u32 2, %s23
          %s972 = ssub.s32 4096, 4096
          %973 = vsyncadd %s962, %s972
          %s974 = smul.addr %s969, 2
          %s975 = sadd.s32 %s970, %s974
          %s976 = smul.addr %s975, 128
          %s977 = scalar_lea.hbm %s3, %s976
          %s978 = sshll.u32 %s965, 4
          %s979 = int_to_ptr.vmem [resolvable:$true] %s978
          %984 = dma.vmem_to_hbm [thread:$0]  %s979, 4096, %s977, %s962, 256, 256, 16
        $region36: #{tpu_custom_call.1} parent=31 // pred_fallthru
          _
      $region32: #{tpu_custom_call.1} parent=5 // pred_fallthru
        _
      %p985 = scmp.le.s32.totalorder 2, %s12
      // Predicated region
      $region37: #{tpu_custom_call.1} parent=5 // pred_check
        %p986 = pneg %p985
      $region38: #{tpu_custom_call.1} parent=5 // pred_check_branch
        %988 = sbr.rel (%p986) target = $region40
      $region39: #{tpu_custom_call.1} parent=5 // pred_region
        %s989 = ssub.s32 %s12, 2
        // Predicated region
        $region41: #{tpu_custom_call.1} parent=39 // pred_check
          %p990 = pneg %p144
        $region42: #{tpu_custom_call.1} parent=39 // pred_check_branch
          %992 = sbr.rel (%p990) target = $region44
        $region43: #{tpu_custom_call.1} parent=39 // pred_region
          %s993 = sand.u32 %s129, 1
          %s994 = scalar_lea.sflag [#allocation3], %s993
          %s995 = sand.u32 %s129, 1
          %s996 = smul.addr %s995, 256
          %s997 = scalar_lea.vmem [#allocation2], %s996
          %998 = dma.done %s994, 4096
        $region44: #{tpu_custom_call.1} parent=39 // pred_fallthru
          _
      $region40: #{tpu_custom_call.1} parent=5 // pred_fallthru
        _
    $region6: #{tpu_custom_call.1} parent=1 // loop_footer
      %s16 = sadd.s32 1, %s12
    $region7: #{tpu_custom_call.1} parent=1 // loop_footer_branch
      %11 = sbr.rel target = $region3
    $region8: #{tpu_custom_call.1} parent=1 // loop_exit
      _
    %999 = vsyncpa [#allocation3], 1
    %s1000 = scalar_lea.sflag [#allocation3], 1
    %1001 = vsyncpa %s1000, 1

</llo_original>
